<compile_context>
chip_gen: v5e
topology: v5e:2x2
jax: 0.10.0
libtpu: 0.0.40
codegen_flags: <defaults>
</compile_context>

<pallas_src>
import jax
import jax.numpy as jnp
from jax.experimental import pallas as pl
from jax.experimental.pallas import tpu as pltpu


# ----------------------------------------------------------------------------
# Fused kernel: conv2(x1) || conv1(x0) + nearest-2x upsample || channel concat
# ----------------------------------------------------------------------------
def _conv_upsample_kernel(x0_ref, x1_ref, w1_ref, b1_ref, w2_ref, b2_ref, o_ref):
    th = x0_ref.shape[1]          # low-res rows in this block
    w = x0_ref.shape[2]           # low-res width
    hh = x1_ref.shape[1]          # = 2*th high-res rows
    ww = x1_ref.shape[2]          # = 2*w  high-res width
    c2 = w1_ref.shape[1]          # output channels per branch

    def silu(y):                  # y * sigmoid(y); exp + reciprocal on the EUP
        return y * pl.reciprocal(1.0 + jnp.exp(-y), approx=True)

    # --- branch 1: conv2(x[1]) = 1x1 conv (channel matmul) + folded BN + SiLU
    xb = x1_ref[0].reshape(hh * ww, x1_ref.shape[3])               # bf16 rows
    y2 = jnp.dot(xb, w2_ref[...], preferred_element_type=jnp.float32) + b2_ref[...]
    y2 = silu(y2).reshape(hh, ww, c2)

    # --- branch 2: conv1(x[0]) + SiLU, then nearest 2x upsample (all in VMEM)
    xa = x0_ref[0].reshape(th * w, x0_ref.shape[3])
    y1 = jnp.dot(xa, w1_ref[...], preferred_element_type=jnp.float32) + b1_ref[...]
    y1 = silu(y1).reshape(th, w, c2)
    # duplicate columns (dx phase): (th, W, c2) -> (th, 2W, c2)
    y1 = jnp.broadcast_to(y1[:, :, None, :], (th, w, 2, c2)).reshape(th, ww, c2)
    # duplicate rows (dy phase): (th, 2W, c2) -> (2*th, 2W, c2)
    y1 = jnp.broadcast_to(y1[:, None, :, :], (th, 2, ww, c2)).reshape(hh, ww, c2)

    # --- channel concat [conv2(x[1]), upsample(conv1(x[0]))]: one dense store
    o_ref[0] = jnp.concatenate([y2, y1], axis=-1).astype(o_ref.dtype)


def _pick_tile_h(H, W, cin, cout):
    """Low-res rows per grid block, sized so a (double-buffered) block set stays
    well inside the scoped-VMEM budget on every TPU generation."""
    per_row = 2 * (2 * W) * (2 * cin) * 2      # x1 tile (bf16): 2 hi rows x 2W x 2cin
    per_row += W * cin * 2                     # x0 tile (bf16)
    per_row += 2 * (2 * W) * cout * 4          # output tile (f32)
    budget = 6 * 1024 * 1024                   # per-buffer budget (pipeline x2-buffers)
    return max(1, min(H, budget // max(per_row, 1)))


# ----------------------------------------------------------------------------
# Forward wrapper (glue: NCHW<->NHWC transposes, row padding)
# ----------------------------------------------------------------------------
@jax.jit
def conv_upsample_forward(x0, x1, params):
    """x0: (B, Cin, H, W), x1: (B, 2*Cin, 2H, 2W) -> (B, Cin, 2H, 2W)  [NCHW]."""
    B, Cin, H, W = x0.shape
    C2 = Cin // 2
    Cout = 2 * C2
    assert x1.shape == (B, 2 * Cin, 2 * H, 2 * W), x1.shape

    w1, b1 = params["conv1"]      # (Cin,  C2), (C2,)
    w2, b2 = params["conv2"]      # (2Cin, C2), (C2,)

    # NCHW -> NHWC (unavoidable layout glue)
    x0n = jnp.transpose(x0, (0, 2, 3, 1))        # (B, H,  W,  Cin)
    x1n = jnp.transpose(x1, (0, 2, 3, 1))        # (B, 2H, 2W, 2Cin)

    th = _pick_tile_h(H, W, Cin, Cout)
    Hp = int(pl.cdiv(H, th)) * th
    if Hp != H:                                  # pad low-res rows to a tile multiple
        x0n = jnp.pad(x0n, ((0, 0), (0, Hp - H), (0, 0), (0, 0)))
        x1n = jnp.pad(x1n, ((0, 0), (0, 2 * (Hp - H)), (0, 0), (0, 0)))

    # bf16 operands (halve HBM traffic, native MXU path); f32 accumulate in-kernel
    x0b = x0n.astype(jnp.bfloat16)
    x1b = x1n.astype(jnp.bfloat16)
    w1b = w1.astype(jnp.bfloat16)
    w2b = w2.astype(jnp.bfloat16)
    b1f = b1.reshape(1, C2).astype(jnp.float32)
    b2f = b2.reshape(1, C2).astype(jnp.float32)

    grid = (B, Hp // th)
    out = pl.pallas_call(
        _conv_upsample_kernel,
        out_shape=jax.ShapeDtypeStruct((B, 2 * Hp, 2 * W, Cout), jnp.float32),
        grid_spec=pltpu.PrefetchScalarGridSpec(
            num_scalar_prefetch=0,
            grid=grid,
            in_specs=[
                pl.BlockSpec((1, th, W, Cin), lambda b, i: (b, i, 0, 0)),            # x0 tile
                pl.BlockSpec((1, 2 * th, 2 * W, 2 * Cin), lambda b, i: (b, i, 0, 0)),  # x1 tile
                pl.BlockSpec((Cin, C2), lambda b, i: (0, 0)),                          # w1
                pl.BlockSpec((1, C2), lambda b, i: (0, 0)),                            # b1
                pl.BlockSpec((2 * Cin, C2), lambda b, i: (0, 0)),                      # w2
                pl.BlockSpec((1, C2), lambda b, i: (0, 0)),                            # b2
            ],
            out_specs=pl.BlockSpec((1, 2 * th, 2 * W, Cout), lambda b, i: (b, i, 0, 0)),
        ),
        compiler_params=pltpu.CompilerParams(
            dimension_semantics=("parallel", "parallel"),   # megacore / 2-TC sharding
            vmem_limit_bytes=48 * 1024 * 1024,              # fits v5e/v6e/v7x budgets
        ),
    )(x0b, x1b, w1b, b1f, w2b, b2f)

    out = out[:, :2 * H]                                    # drop padded rows
    return jnp.transpose(out, (0, 3, 1, 2))                 # back to NCHW


# ----------------------------------------------------------------------------
# Deterministic synthetic parameters (Conv2d weight + folded eval-mode BN)
# ----------------------------------------------------------------------------
def make_conv_bn_params(key, c_in, c_out, k, eps=1e-5):
    kw_, kg, kb, km, kv = jax.random.split(key, 5)
    w = jax.random.normal(kw_, (c_out, c_in, k, k), jnp.float32) * 0.1   # OIHW
    gamma = jax.random.uniform(kg, (c_out,), jnp.float32, 0.5, 1.5)
    beta = jax.random.normal(kb, (c_out,), jnp.float32) * 0.1
    mean = jax.random.normal(km, (c_out,), jnp.float32) * 0.1
    var = jax.random.uniform(kv, (c_out,), jnp.float32, 0.5, 1.5)
    scale = gamma / jnp.sqrt(var + eps)
    w_eff = w * scale[:, None, None, None]
    b_eff = beta - mean * scale
    return w_eff, b_eff


# ----------------------------------------------------------------------------
# Pure-JAX reference (numerical sanity check, f32 end-to-end)
# ----------------------------------------------------------------------------
def ref_forward(x0, x1, folded_params):
    (w1, b1), (w2, b2) = folded_params

    def conv_bn_silu(x, w, b):
        y = jax.lax.conv_general_dilated(
            x, w, window_strides=(1, 1), padding="VALID",
            dimension_numbers=("NCHW", "OIHW", "NCHW"))
        y = y + b[None, :, None, None]
        return y * jax.nn.sigmoid(y)

    y = conv_bn_silu(x0, w1, b1)
    y = jnp.repeat(jnp.repeat(y, 2, axis=2), 2, axis=3)     # nearest 2x upsample
    return jnp.concatenate([conv_bn_silu(x1, w2, b2), y], axis=1)


if __name__ == "__main__":
    key = jax.random.PRNGKey(0)
    B, Cin, H, W = 2, 8, 8, 8          # x[0]: (B, Cin, H, W); x[1]: (B, 2Cin, 2H, 2W)
    C2 = Cin // 2

    k0, k1, kp1, kp2 = jax.random.split(key, 4)
    x0 = jax.random.normal(k0, (B, Cin, H, W), jnp.float32)
    x1 = jax.random.normal(k1, (B, 2 * Cin, 2 * H, 2 * W), jnp.float32)

    p1 = make_conv_bn_params(kp1, Cin, C2, 1)       # conv1: Cin   -> Cin//2
    p2 = make_conv_bn_params(kp2, 2 * Cin, C2, 1)   # conv2: 2*Cin -> Cin//2

    # Repack folded 1x1 weights as (Cin, Cout) matmul matrices
    params = {
        "conv1": (p1[0][:, :, 0, 0].T, p1[1]),
        "conv2": (p2[0][:, :, 0, 0].T, p2[1]),
    }

    out = conv_upsample_forward(x0, x1, params)
    out = jax.block_until_ready(out)

    ref = ref_forward(x0, x1, (p1, p2))
    assert out.shape == (B, Cin, 2 * H, 2 * W), out.shape
    max_err = float(jnp.max(jnp.abs(out - ref)))
    assert jnp.allclose(out, ref, atol=2e-2, rtol=2e-2), max_err

    print("KERNEL_OK")
</pallas_src>

<mosaic_0001>
module attributes {stable_mosaic.version = 11 : i64} {
  func.func @_conv_upsample_kernel(%arg0: i32, %arg1: i32, %arg2: memref<1x8x8x8xbf16, #tpu.memory_space<vmem>>, %arg3: memref<1x16x16x16xbf16, #tpu.memory_space<vmem>>, %arg4: memref<8x4xbf16, #tpu.memory_space<vmem>>, %arg5: memref<1x4xf32, #tpu.memory_space<vmem>>, %arg6: memref<16x4xbf16, #tpu.memory_space<vmem>>, %arg7: memref<1x4xf32, #tpu.memory_space<vmem>>, %arg8: memref<1x16x16x8xf32, #tpu.memory_space<vmem>>) attributes {dimension_semantics = [#tpu.dimension_semantics<parallel>, #tpu.dimension_semantics<parallel>], iteration_bounds = array<i64: 2, 1>, scalar_prefetch = 0 : i64, scratch_operands = 0 : i64, tpu.core_type = #tpu.core_type<tc>, window_params = [{transform_indices = @transform_0, window_bounds = array<i64: 1, 8, 8, 8>}, {transform_indices = @transform_1, window_bounds = array<i64: 1, 16, 16, 16>}, {pipeline_mode = #tpu.pipeline_mode<synchronous>, transform_indices = @transform_2, window_bounds = array<i64: 8, 4>}, {pipeline_mode = #tpu.pipeline_mode<synchronous>, transform_indices = @transform_3, window_bounds = array<i64: 1, 4>}, {pipeline_mode = #tpu.pipeline_mode<synchronous>, transform_indices = @transform_4, window_bounds = array<i64: 16, 4>}, {pipeline_mode = #tpu.pipeline_mode<synchronous>, transform_indices = @transform_5, window_bounds = array<i64: 1, 4>}, {transform_indices = @transform_6, window_bounds = array<i64: 1, 16, 16, 8>}]} {
    %c0 = arith.constant 0 : index
    %c0_0 = arith.constant 0 : index
    %c0_1 = arith.constant 0 : index
    %c0_2 = arith.constant 0 : index
    %0 = vector.load %arg3[%c0, %c0_0, %c0_1, %c0_2] : memref<1x16x16x16xbf16, #tpu.memory_space<vmem>>, vector<1x16x16x16xbf16>
    %1 = vector.shape_cast %0 : vector<1x16x16x16xbf16> to vector<16x16x16xbf16>
    %2 = vector.shape_cast %1 : vector<16x16x16xbf16> to vector<256x16xbf16>
    %c0_3 = arith.constant 0 : index
    %c0_4 = arith.constant 0 : index
    %3 = vector.load %arg6[%c0_3, %c0_4] : memref<16x4xbf16, #tpu.memory_space<vmem>>, vector<16x4xbf16>
    %cst = arith.constant dense<0.000000e+00> : vector<256x4xf32>
    %4 = tpu.matmul %2, %3, %cst {dimension_numbers = #tpu.dot_dimension_numbers<[1], [0], [0], [1], [0, 0, 1, 1], [], []>} : vector<256x16xbf16>, vector<16x4xbf16>, vector<256x4xf32> -> vector<256x4xf32>
    %c0_5 = arith.constant 0 : index
    %c0_6 = arith.constant 0 : index
    %5 = vector.load %arg7[%c0_5, %c0_6] : memref<1x4xf32, #tpu.memory_space<vmem>>, vector<1x4xf32>
    %6 = vector.broadcast %5 : vector<1x4xf32> to vector<256x4xf32>
    %7 = arith.addf %4, %6 : vector<256x4xf32>
    %cst_7 = arith.constant 0.000000e+00 : f32
    %8 = vector.broadcast %cst_7 : f32 to vector<256x4xf32>
    %9 = arith.subf %8, %7 : vector<256x4xf32>
    %10 = math.exp %9 : vector<256x4xf32>
    %cst_8 = arith.constant 1.000000e+00 : f32
    %11 = vector.broadcast %cst_8 : f32 to vector<256x4xf32>
    %12 = arith.addf %11, %10 : vector<256x4xf32>
    %13 = tpu.reciprocal %12 {approx = true} : vector<256x4xf32> -> vector<256x4xf32>
    %14 = arith.mulf %7, %13 : vector<256x4xf32>
    %15 = vector.shape_cast %14 : vector<256x4xf32> to vector<16x16x4xf32>
    %c0_9 = arith.constant 0 : index
    %c0_10 = arith.constant 0 : index
    %c0_11 = arith.constant 0 : index
    %c0_12 = arith.constant 0 : index
    %16 = vector.load %arg2[%c0_9, %c0_10, %c0_11, %c0_12] : memref<1x8x8x8xbf16, #tpu.memory_space<vmem>>, vector<1x8x8x8xbf16>
    %17 = vector.shape_cast %16 : vector<1x8x8x8xbf16> to vector<8x8x8xbf16>
    %18 = vector.shape_cast %17 : vector<8x8x8xbf16> to vector<64x8xbf16>
    %c0_13 = arith.constant 0 : index
    %c0_14 = arith.constant 0 : index
    %19 = vector.load %arg4[%c0_13, %c0_14] : memref<8x4xbf16, #tpu.memory_space<vmem>>, vector<8x4xbf16>
    %cst_15 = arith.constant dense<0.000000e+00> : vector<64x4xf32>
    %20 = tpu.matmul %18, %19, %cst_15 {dimension_numbers = #tpu.dot_dimension_numbers<[1], [0], [0], [1], [0, 0, 1, 1], [], []>} : vector<64x8xbf16>, vector<8x4xbf16>, vector<64x4xf32> -> vector<64x4xf32>
    %c0_16 = arith.constant 0 : index
    %c0_17 = arith.constant 0 : index
    %21 = vector.load %arg5[%c0_16, %c0_17] : memref<1x4xf32, #tpu.memory_space<vmem>>, vector<1x4xf32>
    %22 = vector.broadcast %21 : vector<1x4xf32> to vector<64x4xf32>
    %23 = arith.addf %20, %22 : vector<64x4xf32>
    %cst_18 = arith.constant 0.000000e+00 : f32
    %24 = vector.broadcast %cst_18 : f32 to vector<64x4xf32>
    %25 = arith.subf %24, %23 : vector<64x4xf32>
    %26 = math.exp %25 : vector<64x4xf32>
    %cst_19 = arith.constant 1.000000e+00 : f32
    %27 = vector.broadcast %cst_19 : f32 to vector<64x4xf32>
    %28 = arith.addf %27, %26 : vector<64x4xf32>
    %29 = tpu.reciprocal %28 {approx = true} : vector<64x4xf32> -> vector<64x4xf32>
    %30 = arith.mulf %23, %29 : vector<64x4xf32>
    %31 = vector.shape_cast %30 : vector<64x4xf32> to vector<8x8x4xf32>
    %32 = vector.shape_cast %31 : vector<8x8x4xf32> to vector<8x8x1x4xf32>
    %33 = vector.shape_cast %32 : vector<8x8x1x4xf32> to vector<8x8x1x4xf32>
    %34 = vector.broadcast %33 : vector<8x8x1x4xf32> to vector<8x8x2x4xf32>
    %35 = vector.shape_cast %34 : vector<8x8x2x4xf32> to vector<8x16x4xf32>
    %36 = vector.shape_cast %35 : vector<8x16x4xf32> to vector<8x1x16x4xf32>
    %37 = vector.shape_cast %36 : vector<8x1x16x4xf32> to vector<8x1x16x4xf32>
    %38 = vector.broadcast %37 : vector<8x1x16x4xf32> to vector<8x2x16x4xf32>
    %39 = vector.shape_cast %38 : vector<8x2x16x4xf32> to vector<16x16x4xf32>
    %40 = tpu.concatenate %15, %39 in 2 : vector<16x16x4xf32>, vector<16x16x4xf32> -> vector<16x16x8xf32>
    %c0_20 = arith.constant 0 : index
    %c0_21 = arith.constant 0 : index
    %c0_22 = arith.constant 0 : index
    %c0_23 = arith.constant 0 : index
    %41 = vector.load %arg8[%c0_20, %c0_21, %c0_22, %c0_23] : memref<1x16x16x8xf32, #tpu.memory_space<vmem>>, vector<1x16x16x8xf32>
    %42 = vector.shape_cast %41 : vector<1x16x16x8xf32> to vector<16x16x8xf32>
    %43 = vector.shape_cast %40 : vector<16x16x8xf32> to vector<1x16x16x8xf32>
    tpu.vector_store %arg8[%c0_20, %c0_21, %c0_22, %c0_23], %43 {strides = array<i32>} : memref<1x16x16x8xf32, #tpu.memory_space<vmem>>, vector<1x16x16x8xf32>,
    return
  }
  func.func @transform_0(%arg0: i32, %arg1: i32) -> (i32, i32, i32, i32) {
    %c0_i32 = arith.constant 0 : i32
    %c0_i32_0 = arith.constant 0 : i32
    %c0_i32_1 = arith.constant 0 : i32
    return %arg0, %arg1, %c0_i32, %c0_i32_0 : i32, i32, i32, i32
  }
  func.func @transform_1(%arg0: i32, %arg1: i32) -> (i32, i32, i32, i32) {
    %c0_i32 = arith.constant 0 : i32
    %c0_i32_0 = arith.constant 0 : i32
    %c0_i32_1 = arith.constant 0 : i32
    return %arg0, %arg1, %c0_i32, %c0_i32_0 : i32, i32, i32, i32
  }
  func.func @transform_2(%arg0: i32, %arg1: i32) -> (i32, i32) {
    %c0_i32 = arith.constant 0 : i32
    %c0_i32_0 = arith.constant 0 : i32
    %c0_i32_1 = arith.constant 0 : i32
    return %c0_i32, %c0_i32_0 : i32, i32
  }
  func.func @transform_3(%arg0: i32, %arg1: i32) -> (i32, i32) {
    %c0_i32 = arith.constant 0 : i32
    %c0_i32_0 = arith.constant 0 : i32
    %c0_i32_1 = arith.constant 0 : i32
    return %c0_i32, %c0_i32_0 : i32, i32
  }
  func.func @transform_4(%arg0: i32, %arg1: i32) -> (i32, i32) {
    %c0_i32 = arith.constant 0 : i32
    %c0_i32_0 = arith.constant 0 : i32
    %c0_i32_1 = arith.constant 0 : i32
    return %c0_i32, %c0_i32_0 : i32, i32
  }
  func.func @transform_5(%arg0: i32, %arg1: i32) -> (i32, i32) {
    %c0_i32 = arith.constant 0 : i32
    %c0_i32_0 = arith.constant 0 : i32
    %c0_i32_1 = arith.constant 0 : i32
    return %c0_i32, %c0_i32_0 : i32, i32
  }
  func.func @transform_6(%arg0: i32, %arg1: i32) -> (i32, i32, i32, i32) {
    %c0_i32 = arith.constant 0 : i32
    %c0_i32_0 = arith.constant 0 : i32
    %c0_i32_1 = arith.constant 0 : i32
    return %arg0, %arg1, %c0_i32, %c0_i32_0 : i32, i32, i32, i32
  }
}

</mosaic_0001>

<llo_original>
// kernel: conv_upsample_forward.1
$region0: #{conv_upsample_forward.1}
  #allocation0 [shape = 'u32[]', space=smem, size = 0x4, offset = 0x4, fixed_abs, tag = 'smem constant byte address 0x4 - core index']
  #allocation1 [shape = 'u32[72,128]{1,0:T(1,128)}', space=vmem, size = 0x9000, scoped, tag = 'internal scratch']
  %s0 = inlined_call_operand.vmem [shape: bf16[2,8,8,8], index: 0, kind: input, shape index: {}]
  %s1 = inlined_call_operand.vmem [shape: bf16[2,16,16,16], index: 1, kind: input, shape index: {}]
  %s2 = inlined_call_operand.vmem [shape: bf16[8,4], index: 2, kind: input, shape index: {}]
  %s3 = inlined_call_operand.vmem [shape: f32[1,4], index: 3, kind: input, shape index: {}]
  %s4 = inlined_call_operand.vmem [shape: bf16[16,4], index: 4, kind: input, shape index: {}]
  %s5 = inlined_call_operand.vmem [shape: f32[1,4], index: 5, kind: input, shape index: {}]
  %s6 = inlined_call_operand.vmem [shape: f32[2,16,16,8], index: 6, kind: output, shape index: {}]
  %s7 = sld [smem:[#allocation0]]
  $region57: #{conv_upsample_forward.1} parent=0
    _
  %s9 = ssub.s32 1, %s7
  %s10 = scalar_select 0, %s9, %s7
  loop: start=0, step=1, limit=4
  $region2: #{conv_upsample_forward.1} parent=0 // loop_pre_header
    _
  $region3: #{conv_upsample_forward.1} parent=0 // loop_header
    %s12 = sphi 0, %s16
    %p13 = scmp.ge.s32.totalorder %s12, 4
    %s19 = sphi 0, %s31
    %s20 = sphi 0, %s27
    %s21 = sphi 0, %s19
    %s22 = sphi 0, %s20
    %s23 = sphi 0, %s21
    %s24 = sphi 0, %s22
    %s36 = sphi 0, %s38
    %s39 = sphi 0, %s36
    %s40 = sphi 0, %s39
    %s56 = sphi 0, %s40
    %s64 = sphi 0, %s66
    %s67 = sphi 0, %s64
    %s68 = sphi 0, %s67
    %s84 = sphi 0, %s68
    %s88 = sphi 0, %s88
    %s90 = sphi 0, %s88
    %s91 = sphi 0, %s90
    %s105 = sphi 0, %s91
    %s109 = sphi 0, %s109
    %s111 = sphi 0, %s109
    %s112 = sphi 0, %s111
    %s126 = sphi 0, %s112
    %s130 = sphi 0, %s130
    %s132 = sphi 0, %s130
    %s133 = sphi 0, %s132
    %s147 = sphi 0, %s133
    %s151 = sphi 0, %s151
    %s153 = sphi 0, %s151
    %s154 = sphi 0, %s153
    %s168 = sphi 0, %s154
    %s176 = sphi 0, %s178
    %s179 = sphi 0, %s176
    %s180 = sphi 0, %s179
    %s196 = sphi 0, %s180
  $region4: #{conv_upsample_forward.1} parent=0 // loop_header_branch
    %15 = sbr.rel (%p13) target = $region8
  $region5: #{conv_upsample_forward.1} parent=0 // loop_body
    %s17 = ssub.s32 %s12, 1
    %s18 = ssub.s32 %s12, 2
    %s25 = sadd.s32 1, %s20
    %p26 = scmp.ge.s32.totalorder %s25, 1
    %s27 = scalar_select %p26, 0, %s25
    %s28 = sadd.s32 1, %s19
    %s29 = scalar_select %p26, %s28, %s19
    %p30 = scmp.ge.s32.totalorder %s29, 2
    %s31 = scalar_select %p30, 0, %s29
    %s32 = ssub.s32 %s19, %s31
    %s33 = ssub.s32 %s20, %s27
    %s34 = sor.u32 %s32, %s33
    %p35 = scmp.eq.s32.totalorder %s34, 0
    %s37 = sadd.s32 %s36, 1
    %s38 = scalar_select %p35, %s36, %s37
    %p41 = pneg %p35
    %p42 = scmp.eq.s32.totalorder %s12, 1
    %p43 = por %p41, %p42
    %p44 = scmp.ne.s32.totalorder %s36, %s39
    %p45 = scmp.eq.s32.totalorder %s12, 0
    %p46 = por %p44, %p45
    %p47 = scmp.ne.s32.totalorder %s36, %s39
    %p48 = scmp.eq.s32.totalorder %s17, 1
    %p49 = por %p47, %p48
    %p50 = scmp.ne.s32.totalorder %s39, %s40
    %p51 = scmp.eq.s32.totalorder %s17, 0
    %p52 = por %p50, %p51
    %p53 = scmp.ne.s32.totalorder %s39, %s40
    %p54 = scmp.eq.s32.totalorder %s18, 1
    %p55 = por %p53, %p54
    %p57 = scmp.ne.s32.totalorder %s40, %s56
    %p58 = scmp.eq.s32.totalorder %s18, 0
    %p59 = por %p57, %p58
    %s60 = ssub.s32 %s19, %s31
    %s61 = ssub.s32 %s20, %s27
    %s62 = sor.u32 %s60, %s61
    %p63 = scmp.eq.s32.totalorder %s62, 0
    %s65 = sadd.s32 %s64, 1
    %s66 = scalar_select %p63, %s64, %s65
    %p69 = pneg %p63
    %p70 = scmp.eq.s32.totalorder %s12, 1
    %p71 = por %p69, %p70
    %p72 = scmp.ne.s32.totalorder %s64, %s67
    %p73 = scmp.eq.s32.totalorder %s12, 0
    %p74 = por %p72, %p73
    %p75 = scmp.ne.s32.totalorder %s64, %s67
    %p76 = scmp.eq.s32.totalorder %s17, 1
    %p77 = por %p75, %p76
    %p78 = scmp.ne.s32.totalorder %s67, %s68
    %p79 = scmp.eq.s32.totalorder %s17, 0
    %p80 = por %p78, %p79
    %p81 = scmp.ne.s32.totalorder %s67, %s68
    %p82 = scmp.eq.s32.totalorder %s18, 1
    %p83 = por %p81, %p82
    %p85 = scmp.ne.s32.totalorder %s68, %s84
    %p86 = scmp.eq.s32.totalorder %s18, 0
    %p87 = por %p85, %p86
    %s89 = sadd.s32 %s88, 1
    %p92 = scmp.eq.s32.totalorder %s12, 1
    %p93 = scmp.ne.s32.totalorder %s88, %s90
    %p94 = scmp.eq.s32.totalorder %s12, 0
    %p95 = por %p93, %p94
    %p96 = scmp.ne.s32.totalorder %s88, %s90
    %p97 = scmp.eq.s32.totalorder %s17, 1
    %p98 = por %p96, %p97
    %p99 = scmp.ne.s32.totalorder %s90, %s91
    %p100 = scmp.eq.s32.totalorder %s17, 0
    %p101 = por %p99, %p100
    %p102 = scmp.ne.s32.totalorder %s90, %s91
    %p103 = scmp.eq.s32.totalorder %s18, 1
    %p104 = por %p102, %p103
    %p106 = scmp.ne.s32.totalorder %s91, %s105
    %p107 = scmp.eq.s32.totalorder %s18, 0
    %p108 = por %p106, %p107
    %s110 = sadd.s32 %s109, 1
    %p113 = scmp.eq.s32.totalorder %s12, 1
    %p114 = scmp.ne.s32.totalorder %s109, %s111
    %p115 = scmp.eq.s32.totalorder %s12, 0
    %p116 = por %p114, %p115
    %p117 = scmp.ne.s32.totalorder %s109, %s111
    %p118 = scmp.eq.s32.totalorder %s17, 1
    %p119 = por %p117, %p118
    %p120 = scmp.ne.s32.totalorder %s111, %s112
    %p121 = scmp.eq.s32.totalorder %s17, 0
    %p122 = por %p120, %p121
    %p123 = scmp.ne.s32.totalorder %s111, %s112
    %p124 = scmp.eq.s32.totalorder %s18, 1
    %p125 = por %p123, %p124
    %p127 = scmp.ne.s32.totalorder %s112, %s126
    %p128 = scmp.eq.s32.totalorder %s18, 0
    %p129 = por %p127, %p128
    %s131 = sadd.s32 %s130, 1
    %p134 = scmp.eq.s32.totalorder %s12, 1
    %p135 = scmp.ne.s32.totalorder %s130, %s132
    %p136 = scmp.eq.s32.totalorder %s12, 0
    %p137 = por %p135, %p136
    %p138 = scmp.ne.s32.totalorder %s130, %s132
    %p139 = scmp.eq.s32.totalorder %s17, 1
    %p140 = por %p138, %p139
    %p141 = scmp.ne.s32.totalorder %s132, %s133
    %p142 = scmp.eq.s32.totalorder %s17, 0
    %p143 = por %p141, %p142
    %p144 = scmp.ne.s32.totalorder %s132, %s133
    %p145 = scmp.eq.s32.totalorder %s18, 1
    %p146 = por %p144, %p145
    %p148 = scmp.ne.s32.totalorder %s133, %s147
    %p149 = scmp.eq.s32.totalorder %s18, 0
    %p150 = por %p148, %p149
    %s152 = sadd.s32 %s151, 1
    %p155 = scmp.eq.s32.totalorder %s12, 1
    %p156 = scmp.ne.s32.totalorder %s151, %s153
    %p157 = scmp.eq.s32.totalorder %s12, 0
    %p158 = por %p156, %p157
    %p159 = scmp.ne.s32.totalorder %s151, %s153
    %p160 = scmp.eq.s32.totalorder %s17, 1
    %p161 = por %p159, %p160
    %p162 = scmp.ne.s32.totalorder %s153, %s154
    %p163 = scmp.eq.s32.totalorder %s17, 0
    %p164 = por %p162, %p163
    %p165 = scmp.ne.s32.totalorder %s153, %s154
    %p166 = scmp.eq.s32.totalorder %s18, 1
    %p167 = por %p165, %p166
    %p169 = scmp.ne.s32.totalorder %s154, %s168
    %p170 = scmp.eq.s32.totalorder %s18, 0
    %p171 = por %p169, %p170
    %s172 = ssub.s32 %s19, %s31
    %s173 = ssub.s32 %s20, %s27
    %s174 = sor.u32 %s172, %s173
    %p175 = scmp.eq.s32.totalorder %s174, 0
    %s177 = sadd.s32 %s176, 1
    %s178 = scalar_select %p175, %s176, %s177
    %p181 = pneg %p175
    %p182 = scmp.eq.s32.totalorder %s12, 1
    %p183 = por %p181, %p182
    %p184 = scmp.ne.s32.totalorder %s176, %s179
    %p185 = scmp.eq.s32.totalorder %s12, 0
    %p186 = por %p184, %p185
    %p187 = scmp.ne.s32.totalorder %s176, %s179
    %p188 = scmp.eq.s32.totalorder %s17, 1
    %p189 = por %p187, %p188
    %p190 = scmp.ne.s32.totalorder %s179, %s180
    %p191 = scmp.eq.s32.totalorder %s17, 0
    %p192 = por %p190, %p191
    %p193 = scmp.ne.s32.totalorder %s179, %s180
    %p194 = scmp.eq.s32.totalorder %s18, 1
    %p195 = por %p193, %p194
    %p197 = scmp.ne.s32.totalorder %s180, %s196
    %p198 = scmp.eq.s32.totalorder %s18, 0
    %p199 = por %p197, %p198
    %p200 = scmp.le.s32.totalorder 1, %s12
    %p201 = scmp.lt.s32.totalorder %s12, 3
    %p202 = pnand %p200, %p201
    %p203 = pneg %p202
    // Predicated region
    $region9: #{conv_upsample_forward.1} parent=5 // pred_check
      _
    $region10: #{conv_upsample_forward.1} parent=5 // pred_check_branch
      %205 = sbr.rel (%p202) target = $region12
    $region11: #{conv_upsample_forward.1} parent=5 // pred_region
      %s206 = ssub.s32 %s12, 1
      // Predicated region
      $region13: #{conv_upsample_forward.1} parent=11 // pred_check
        %p207 = pneg %p101
      $region14: #{conv_upsample_forward.1} parent=11 // pred_check_branch
        %209 = sbr.rel (%p207) target = $region16
      $region15: #{conv_upsample_forward.1} parent=11 // pred_region
        _
      $region16: #{conv_upsample_forward.1} parent=11 // pred_fallthru
        _
      // Predicated region
      $region17: #{conv_upsample_forward.1} parent=11 // pred_check
        %p210 = pneg %p122
      $region18: #{conv_upsample_forward.1} parent=11 // pred_check_branch
        %212 = sbr.rel (%p210) target = $region20
      $region19: #{conv_upsample_forward.1} parent=11 // pred_region
        _
      $region20: #{conv_upsample_forward.1} parent=11 // pred_fallthru
        _
      // Predicated region
      $region21: #{conv_upsample_forward.1} parent=11 // pred_check
        %p213 = pneg %p143
      $region22: #{conv_upsample_forward.1} parent=11 // pred_check_branch
        %215 = sbr.rel (%p213) target = $region24
      $region23: #{conv_upsample_forward.1} parent=11 // pred_region
        _
      $region24: #{conv_upsample_forward.1} parent=11 // pred_fallthru
        _
      // Predicated region
      $region25: #{conv_upsample_forward.1} parent=11 // pred_check
        %p216 = pneg %p164
      $region26: #{conv_upsample_forward.1} parent=11 // pred_check_branch
        %218 = sbr.rel (%p216) target = $region28
      $region27: #{conv_upsample_forward.1} parent=11 // pred_region
        _
      $region28: #{conv_upsample_forward.1} parent=11 // pred_fallthru
        _
    $region12: #{conv_upsample_forward.1} parent=5 // pred_fallthru
      _
    %p219 = scmp.lt.s32.totalorder %s12, 2
    // Predicated region
    $region29: #{conv_upsample_forward.1} parent=5 // pred_check
      %p220 = pneg %p219
    $region30: #{conv_upsample_forward.1} parent=5 // pred_check_branch
      %222 = sbr.rel (%p220) target = $region32
    $region31: #{conv_upsample_forward.1} parent=5 // pred_region
      // Predicated region
      $region33: #{conv_upsample_forward.1} parent=31 // pred_check
        %p223 = pneg %p46
      $region34: #{conv_upsample_forward.1} parent=31 // pred_check_branch
        %225 = sbr.rel (%p223) target = $region36
      $region35: #{conv_upsample_forward.1} parent=31 // pred_region
        %s226 = smul.u32 8, %s20
        %p227 = scmp.lt.s32.totalorder %s19, 1
        %s228 = scalar_select %p227, %s19, 1
        %p229 = scmp.lt.s32.totalorder %s226, 7
        %s230 = scalar_select %p229, %s226, 7
        %s231 = smul.addr %s228, 8
        %s232 = sadd.s32 %s230, %s231
        %s233 = smul.addr %s232, 4
        %s234 = scalar_lea.vmem %s0, %s233
        %s235 = smul.u32 8, %s20
      $region36: #{conv_upsample_forward.1} parent=31 // pred_fallthru
        _
      // Predicated region
      $region37: #{conv_upsample_forward.1} parent=31 // pred_check
        %p236 = pneg %p74
      $region38: #{conv_upsample_forward.1} parent=31 // pred_check_branch
        %238 = sbr.rel (%p236) target = $region40
      $region39: #{conv_upsample_forward.1} parent=31 // pred_region
        %s239 = smul.u32 16, %s20
        %p240 = scmp.lt.s32.totalorder %s19, 1
        %s241 = scalar_select %p240, %s19, 1
        %p242 = scmp.lt.s32.totalorder %s239, 15
        %s243 = scalar_select %p242, %s239, 15
        %s244 = smul.addr %s243, 2
        %s245 = smul.addr %s241, 32
        %s246 = sadd.s32 %s244, %s245
        %s247 = smul.addr %s246, 4
        %s248 = scalar_lea.vmem %s1, %s247
        %s249 = smul.u32 16, %s20
      $region40: #{conv_upsample_forward.1} parent=31 // pred_fallthru
        _
    $region32: #{conv_upsample_forward.1} parent=5 // pred_fallthru
      _
    %p250 = scmp.le.s32.totalorder 1, %s12
    %p251 = scmp.lt.s32.totalorder %s12, 3
    %p252 = pnand %p250, %p251
    %p253 = pneg %p252
    // Predicated region
    $region41: #{conv_upsample_forward.1} parent=5 // pred_check
      _
    $region42: #{conv_upsample_forward.1} parent=5 // pred_check_branch
      %255 = sbr.rel (%p252) target = $region44
    $region43: #{conv_upsample_forward.1} parent=5 // pred_region
      %s256 = ssub.s32 %s12, 1
      %s257 = smul.u32 8, %s22
      %p258 = scmp.lt.s32.totalorder %s21, 1
      %s259 = scalar_select %p258, %s21, 1
      %p260 = scmp.lt.s32.totalorder %s257, 7
      %s261 = scalar_select %p260, %s257, 7
      %s262 = smul.addr %s259, 8
      %s263 = sadd.s32 %s261, %s262
      %s264 = smul.addr %s263, 4
      %s265 = scalar_lea.vmem %s0, %s264
      %p266 = pneg %p52
      %p267 = pneg %p49
      %s268 = smul.u32 16, %s22
      %p269 = scmp.lt.s32.totalorder %s21, 1
      %s270 = scalar_select %p269, %s21, 1
      %p271 = scmp.lt.s32.totalorder %s268, 15
      %s272 = scalar_select %p271, %s268, 15
      %s273 = smul.addr %s272, 2
      %s274 = smul.addr %s270, 32
      %s275 = sadd.s32 %s273, %s274
      %s276 = smul.addr %s275, 4
      %s277 = scalar_lea.vmem %s1, %s276
      %p278 = pneg %p80
      %p279 = pneg %p77
      %p280 = pneg %p101
      %p281 = pneg %p98
      %p282 = pneg %p122
      %p283 = pneg %p119
      %p284 = pneg %p143
      %p285 = pneg %p140
      %p286 = pneg %p164
      %p287 = pneg %p161
      %p288 = pneg %p192
      %p289 = pneg %p189
      %s290 = smul.u32 16, %s22
      %p291 = scmp.lt.s32.totalorder %s21, 1
      %s292 = scalar_select %p291, %s21, 1
      %p293 = scmp.lt.s32.totalorder %s290, 15
      %s294 = scalar_select %p293, %s290, 15
      %s295 = smul.addr %s294, 2
      %s296 = smul.addr %s292, 32
      %s297 = sadd.s32 %s295, %s296
      %s298 = smul.addr %s297, 8
      %s299 = scalar_lea.vmem %s6, %s298
      %s300 = smul.u32 8, %s22
      %p301 = scmp.lt.s32.totalorder %s21, 1
      %s302 = scalar_select %p301, %s21, 1
      %p303 = scmp.lt.s32.totalorder %s300, 7
      %s304 = scalar_select %p303, %s300, 7
      %s305 = smul.addr %s302, 8
      %s306 = sadd.s32 %s304, %s305
      %s307 = smul.addr %s306, 4
      %s308 = scalar_lea.vmem %s0, %s307
      %s309 = smul.u32 8, %s22
      %s310 = smul.u32 16, %s22
      %p311 = scmp.lt.s32.totalorder %s21, 1
      %s312 = scalar_select %p311, %s21, 1
      %p313 = scmp.lt.s32.totalorder %s310, 15
      %s314 = scalar_select %p313, %s310, 15
      %s315 = smul.addr %s314, 2
      %s316 = smul.addr %s312, 32
      %s317 = sadd.s32 %s315, %s316
      %s318 = smul.addr %s317, 4
      %s319 = scalar_lea.vmem %s1, %s318
      %s320 = smul.u32 16, %s22
      %s321 = smul.u32 16, %s22
      %p322 = scmp.lt.s32.totalorder %s21, 1
      %s323 = scalar_select %p322, %s21, 1
      %p324 = scmp.lt.s32.totalorder %s321, 15
      %s325 = scalar_select %p324, %s321, 15
      %s326 = smul.addr %s325, 2
      %s327 = smul.addr %s323, 32
      %s328 = sadd.s32 %s326, %s327
      %s329 = smul.addr %s328, 8
      %s330 = scalar_lea.vmem %s6, %s329
      %s331 = smul.u32 16, %s22
      %v333 = vld [vmem:[%s319] sm:$0xf]
      %v334 = vld [vmem:[%s319 + $0x4] sm:$0xf]
      %v335 = vld [vmem:[%s319 + $0x8] sm:$0xf]
      %v336 = vld [vmem:[%s319 + $0xc] sm:$0xf]
      %v337 = vld [vmem:[%s319 + $0x10] sm:$0xf]
      %v338 = vld [vmem:[%s319 + $0x14] sm:$0xf]
      %v339 = vld [vmem:[%s319 + $0x18] sm:$0xf]
      %v340 = vld [vmem:[%s319 + $0x1c] sm:$0xf]
      %v341 = vld [vmem:[%s319 + $0x20] sm:$0xf]
      %v342 = vld [vmem:[%s319 + $0x24] sm:$0xf]
      %v343 = vld [vmem:[%s319 + $0x28] sm:$0xf]
      %v344 = vld [vmem:[%s319 + $0x2c] sm:$0xf]
      %v345 = vld [vmem:[%s319 + $0x30] sm:$0xf]
      %v346 = vld [vmem:[%s319 + $0x34] sm:$0xf]
      %v347 = vld [vmem:[%s319 + $0x38] sm:$0xf]
      %v348 = vld [vmem:[%s319 + $0x3c] sm:$0xf]
      %v349 = vld [vmem:[%s319 + $0x40] sm:$0xf]
      %v350 = vld [vmem:[%s319 + $0x44] sm:$0xf]
      %v351 = vld [vmem:[%s319 + $0x48] sm:$0xf]
      %v352 = vld [vmem:[%s319 + $0x4c] sm:$0xf]
      %v353 = vld [vmem:[%s319 + $0x50] sm:$0xf]
      %v354 = vld [vmem:[%s319 + $0x54] sm:$0xf]
      %v355 = vld [vmem:[%s319 + $0x58] sm:$0xf]
      %v356 = vld [vmem:[%s319 + $0x5c] sm:$0xf]
      %v357 = vld [vmem:[%s319 + $0x60] sm:$0xf]
      %v358 = vld [vmem:[%s319 + $0x64] sm:$0xf]
      %v359 = vld [vmem:[%s319 + $0x68] sm:$0xf]
      %v360 = vld [vmem:[%s319 + $0x6c] sm:$0xf]
      %v361 = vld [vmem:[%s319 + $0x70] sm:$0xf]
      %v362 = vld [vmem:[%s319 + $0x74] sm:$0xf]
      %v363 = vld [vmem:[%s319 + $0x78] sm:$0xf]
      %v364 = vld [vmem:[%s319 + $0x7c] sm:$0xf]
      %v365 = vld [vmem:[%s4] sm:$0xf]
      %v366 = vld [vmem:[%s4 + $0x4] sm:$0xf]
      %v367 = vld [vmem:[%s5] sm:$0x1]
      %v369 = vperm.slane %v367, 0
      %v403 = vunpack.c.l.b16 %v333
      %v404 = vunpack.c.l.b16 %v334
      %v405 = vunpack.c.l.b16 %v335
      %v406 = vunpack.c.l.b16 %v336
      %v407 = vunpack.c.l.b16 %v337
      %v408 = vunpack.c.l.b16 %v338
      %v409 = vunpack.c.l.b16 %v339
      %v410 = vunpack.c.l.b16 %v340
      %v411 = vunpack.c.l.b16 %v341
      %v412 = vunpack.c.l.b16 %v342
      %v413 = vunpack.c.l.b16 %v343
      %v414 = vunpack.c.l.b16 %v344
      %v415 = vunpack.c.l.b16 %v345
      %v416 = vunpack.c.l.b16 %v346
      %v417 = vunpack.c.l.b16 %v347
      %v418 = vunpack.c.l.b16 %v348
      %v419 = vunpack.c.l.b16 %v349
      %v420 = vunpack.c.l.b16 %v350
      %v421 = vunpack.c.l.b16 %v351
      %v422 = vunpack.c.l.b16 %v352
      %v423 = vunpack.c.l.b16 %v353
      %v424 = vunpack.c.l.b16 %v354
      %v425 = vunpack.c.l.b16 %v355
      %v426 = vunpack.c.l.b16 %v356
      %v427 = vunpack.c.l.b16 %v357
      %v428 = vunpack.c.l.b16 %v358
      %v429 = vunpack.c.l.b16 %v359
      %v430 = vunpack.c.l.b16 %v360
      %v431 = vunpack.c.l.b16 %v361
      %v432 = vunpack.c.l.b16 %v362
      %v433 = vunpack.c.l.b16 %v363
      %v434 = vunpack.c.l.b16 %v364
      %v435 = vpack.c.b16 %v404, %v403
      %v436 = vpack.c.b16 %v406, %v405
      %v437 = vpack.c.b16 %v408, %v407
      %v438 = vpack.c.b16 %v410, %v409
      %v439 = vpack.c.b16 %v412, %v411
      %v440 = vpack.c.b16 %v414, %v413
      %v441 = vpack.c.b16 %v416, %v415
      %v442 = vpack.c.b16 %v418, %v417
      %v443 = vpack.c.b16 %v420, %v419
      %v444 = vpack.c.b16 %v422, %v421
      %v445 = vpack.c.b16 %v424, %v423
      %v446 = vpack.c.b16 %v426, %v425
      %v447 = vpack.c.b16 %v428, %v427
      %v448 = vpack.c.b16 %v430, %v429
      %v449 = vpack.c.b16 %v432, %v431
      %v450 = vpack.c.b16 %v434, %v433
      %v453 = vunpack.c.l.b16 %v365
      %v454 = vunpack.c.l.b16 %v366
      %v455 = vpack.c.b16 %v454, %v453
      %vm457 = vcmask 130048
      %v459 = vsel %vm457, %v435, 0
      %v462 = vsel %vm457, %v436, 0
      %v465 = vsel %vm457, %v437, 0
      %v468 = vsel %vm457, %v438, 0
      %v471 = vsel %vm457, %v439, 0
      %v474 = vsel %vm457, %v440, 0
      %v477 = vsel %vm457, %v441, 0
      %v480 = vsel %vm457, %v442, 0
      %v483 = vsel %vm457, %v443, 0
      %v486 = vsel %vm457, %v444, 0
      %v489 = vsel %vm457, %v445, 0
      %v492 = vsel %vm457, %v446, 0
      %v495 = vsel %vm457, %v447, 0
      %v498 = vsel %vm457, %v448, 0
      %v501 = vsel %vm457, %v449, 0
      %v504 = vsel %vm457, %v450, 0
      %506 = vmatpush.bf16.msra.mxu0 0
      %507 = vmatpush.bf16.msra.mxu0 0
      %508 = vmatpush.bf16.msra.mxu0 0
      %509 = vmatpush.bf16.msra.mxu0 0
      %510 = vmatpush.bf16.msra.mxu0 0
      %511 = vmatpush.bf16.msra.mxu0 0
      %512 = vmatpush.bf16.msra.mxu0 0
      %513 = vmatpush.bf16.msra.mxu0 %v455
      %514 = vmatmul.bf16.gmra.mxu0 %v459
      %v515 = vpop.f32.mrf.mxu0
      %v516 = vadd.f32 %v369, %v515
      %v517 = vpop.f32.mrf.mxu0
      %v518 = vadd.f32 %v369, %v517
      %519 = vmatmul.bf16.gmra.mxu0 %v462
      %v520 = vpop.f32.mrf.mxu0
      %v521 = vadd.f32 %v369, %v520
      %v522 = vpop.f32.mrf.mxu0
      %v523 = vadd.f32 %v369, %v522
      %524 = vmatmul.bf16.gmra.mxu0 %v465
      %v525 = vpop.f32.mrf.mxu0
      %v526 = vadd.f32 %v369, %v525
      %v527 = vpop.f32.mrf.mxu0
      %v528 = vadd.f32 %v369, %v527
      %529 = vmatmul.bf16.gmra.mxu0 %v468
      %v530 = vpop.f32.mrf.mxu0
      %v531 = vadd.f32 %v369, %v530
      %v532 = vpop.f32.mrf.mxu0
      %v533 = vadd.f32 %v369, %v532
      %534 = vmatmul.bf16.gmra.mxu0 %v471
      %v535 = vpop.f32.mrf.mxu0
      %v536 = vadd.f32 %v369, %v535
      %v537 = vpop.f32.mrf.mxu0
      %v538 = vadd.f32 %v369, %v537
      %539 = vmatmul.bf16.gmra.mxu0 %v474
      %v540 = vpop.f32.mrf.mxu0
      %v541 = vadd.f32 %v369, %v540
      %v542 = vpop.f32.mrf.mxu0
      %v543 = vadd.f32 %v369, %v542
      %544 = vmatmul.bf16.gmra.mxu0 %v477
      %v545 = vpop.f32.mrf.mxu0
      %v546 = vadd.f32 %v369, %v545
      %v547 = vpop.f32.mrf.mxu0
      %v548 = vadd.f32 %v369, %v547
      %549 = vmatmul.bf16.gmra.mxu0 %v480
      %v550 = vpop.f32.mrf.mxu0
      %v551 = vadd.f32 %v369, %v550
      %v552 = vpop.f32.mrf.mxu0
      %v553 = vadd.f32 %v369, %v552
      %554 = vmatmul.bf16.gmra.mxu0 %v483
      %v555 = vpop.f32.mrf.mxu0
      %v556 = vadd.f32 %v369, %v555
      %v557 = vpop.f32.mrf.mxu0
      %v558 = vadd.f32 %v369, %v557
      %559 = vmatmul.bf16.gmra.mxu0 %v486
      %v560 = vpop.f32.mrf.mxu0
      %v561 = vadd.f32 %v369, %v560
      %v562 = vpop.f32.mrf.mxu0
      %v563 = vadd.f32 %v369, %v562
      %564 = vmatmul.bf16.gmra.mxu0 %v489
      %v565 = vpop.f32.mrf.mxu0
      %v566 = vadd.f32 %v369, %v565
      %v567 = vpop.f32.mrf.mxu0
      %v568 = vadd.f32 %v369, %v567
      %569 = vmatmul.bf16.gmra.mxu0 %v492
      %v570 = vpop.f32.mrf.mxu0
      %v571 = vadd.f32 %v369, %v570
      %v572 = vpop.f32.mrf.mxu0
      %v573 = vadd.f32 %v369, %v572
      %574 = vmatmul.bf16.gmra.mxu0 %v495
      %v575 = vpop.f32.mrf.mxu0
      %v576 = vadd.f32 %v369, %v575
      %v577 = vpop.f32.mrf.mxu0
      %v578 = vadd.f32 %v369, %v577
      %579 = vmatmul.bf16.gmra.mxu0 %v498
      %v580 = vpop.f32.mrf.mxu0
      %v581 = vadd.f32 %v369, %v580
      %v582 = vpop.f32.mrf.mxu0
      %v583 = vadd.f32 %v369, %v582
      %584 = vmatmul.bf16.gmra.mxu0 %v501
      %v585 = vpop.f32.mrf.mxu0
      %v586 = vadd.f32 %v369, %v585
      %v587 = vpop.f32.mrf.mxu0
      %v588 = vadd.f32 %v369, %v587
      %589 = vmatmul.bf16.gmra.mxu0 %v504
      %v590 = vpop.f32.mrf.mxu0
      %v591 = vadd.f32 %v369, %v590
      %v592 = vpop.f32.mrf.mxu0
      %v593 = vadd.f32 %v369, %v592
      %594 = vdwg.mxu0
      %v595 = vsub.f32 0.0, %v516
      %v596 = vsub.f32 0.0, %v518
      %v597 = vsub.f32 0.0, %v521
      %v598 = vsub.f32 0.0, %v523
      %v599 = vsub.f32 0.0, %v526
      %v600 = vsub.f32 0.0, %v528
      %v601 = vsub.f32 0.0, %v531
      %v602 = vsub.f32 0.0, %v533
      %v603 = vsub.f32 0.0, %v536
      %v604 = vsub.f32 0.0, %v538
      %v605 = vsub.f32 0.0, %v541
      %v606 = vsub.f32 0.0, %v543
      %v607 = vsub.f32 0.0, %v546
      %v608 = vsub.f32 0.0, %v548
      %v609 = vsub.f32 0.0, %v551
      %v610 = vsub.f32 0.0, %v553
      %v611 = vsub.f32 0.0, %v556
      %v612 = vsub.f32 0.0, %v558
      %v613 = vsub.f32 0.0, %v561
      %v614 = vsub.f32 0.0, %v563
      %v615 = vsub.f32 0.0, %v566
      %v616 = vsub.f32 0.0, %v568
      %v617 = vsub.f32 0.0, %v571
      %v618 = vsub.f32 0.0, %v573
      %v619 = vsub.f32 0.0, %v576
      %v620 = vsub.f32 0.0, %v578
      %v621 = vsub.f32 0.0, %v581
      %v622 = vsub.f32 0.0, %v583
      %v623 = vsub.f32 0.0, %v586
      %v624 = vsub.f32 0.0, %v588
      %v625 = vsub.f32 0.0, %v591
      %v626 = vsub.f32 0.0, %v593
      %v627 = vmul.f32 %v595, 1.442695
      %v628 = vpow.pop %v627
      %v629 = vmul.f32 %v596, 1.442695
      %v630 = vpow.pop %v629
      %v631 = vmul.f32 %v597, 1.442695
      %v632 = vpow.pop %v631
      %v633 = vmul.f32 %v598, 1.442695
      %v634 = vpow.pop %v633
      %v635 = vmul.f32 %v599, 1.442695
      %v636 = vpow.pop %v635
      %v637 = vmul.f32 %v600, 1.442695
      %v638 = vpow.pop %v637
      %v639 = vmul.f32 %v601, 1.442695
      %v640 = vpow.pop %v639
      %v641 = vmul.f32 %v602, 1.442695
      %v642 = vpow.pop %v641
      %v643 = vmul.f32 %v603, 1.442695
      %v644 = vpow.pop %v643
      %v645 = vmul.f32 %v604, 1.442695
      %v646 = vpow.pop %v645
      %v647 = vmul.f32 %v605, 1.442695
      %v648 = vpow.pop %v647
      %v649 = vmul.f32 %v606, 1.442695
      %v650 = vpow.pop %v649
      %v651 = vmul.f32 %v607, 1.442695
      %v652 = vpow.pop %v651
      %v653 = vmul.f32 %v608, 1.442695
      %v654 = vpow.pop %v653
      %v655 = vmul.f32 %v609, 1.442695
      %v656 = vpow.pop %v655
      %v657 = vmul.f32 %v610, 1.442695
      %v658 = vpow.pop %v657
      %v659 = vmul.f32 %v611, 1.442695
      %v660 = vpow.pop %v659
      %v661 = vmul.f32 %v612, 1.442695
      %v662 = vpow.pop %v661
      %v663 = vmul.f32 %v613, 1.442695
      %v664 = vpow.pop %v663
      %v665 = vmul.f32 %v614, 1.442695
      %v666 = vpow.pop %v665
      %v667 = vmul.f32 %v615, 1.442695
      %v668 = vpow.pop %v667
      %v669 = vmul.f32 %v616, 1.442695
      %v670 = vpow.pop %v669
      %v671 = vmul.f32 %v617, 1.442695
      %v672 = vpow.pop %v671
      %v673 = vmul.f32 %v618, 1.442695
      %v674 = vpow.pop %v673
      %v675 = vmul.f32 %v619, 1.442695
      %v676 = vpow.pop %v675
      %v677 = vmul.f32 %v620, 1.442695
      %v678 = vpow.pop %v677
      %v679 = vmul.f32 %v621, 1.442695
      %v680 = vpow.pop %v679
      %v681 = vmul.f32 %v622, 1.442695
      %v682 = vpow.pop %v681
      %v683 = vmul.f32 %v623, 1.442695
      %v684 = vpow.pop %v683
      %v685 = vmul.f32 %v624, 1.442695
      %v686 = vpow.pop %v685
      %v687 = vmul.f32 %v625, 1.442695
      %v688 = vpow.pop %v687
      %v689 = vmul.f32 %v626, 1.442695
      %v690 = vpow.pop %v689
      %v691 = vadd.f32 %v628, 1.0
      %v692 = vadd.f32 %v630, 1.0
      %v693 = vadd.f32 %v632, 1.0
      %v694 = vadd.f32 %v634, 1.0
      %v695 = vadd.f32 %v636, 1.0
      %v696 = vadd.f32 %v638, 1.0
      %v697 = vadd.f32 %v640, 1.0
      %v698 = vadd.f32 %v642, 1.0
      %v699 = vadd.f32 %v644, 1.0
      %v700 = vadd.f32 %v646, 1.0
      %v701 = vadd.f32 %v648, 1.0
      %v702 = vadd.f32 %v650, 1.0
      %v703 = vadd.f32 %v652, 1.0
      %v704 = vadd.f32 %v654, 1.0
      %v705 = vadd.f32 %v656, 1.0
      %v706 = vadd.f32 %v658, 1.0
      %v707 = vadd.f32 %v660, 1.0
      %v708 = vadd.f32 %v662, 1.0
      %v709 = vadd.f32 %v664, 1.0
      %v710 = vadd.f32 %v666, 1.0
      %v711 = vadd.f32 %v668, 1.0
      %v712 = vadd.f32 %v670, 1.0
      %v713 = vadd.f32 %v672, 1.0
      %v714 = vadd.f32 %v674, 1.0
      %v715 = vadd.f32 %v676, 1.0
      %v716 = vadd.f32 %v678, 1.0
      %v717 = vadd.f32 %v680, 1.0
      %v718 = vadd.f32 %v682, 1.0
      %v719 = vadd.f32 %v684, 1.0
      %v720 = vadd.f32 %v686, 1.0
      %v721 = vadd.f32 %v688, 1.0
      %v722 = vadd.f32 %v690, 1.0
      %v723 = vrcp.pop %v691
      %v724 = vrcp.pop %v692
      %v725 = vrcp.pop %v693
      %v726 = vrcp.pop %v694
      %v727 = vrcp.pop %v695
      %v728 = vrcp.pop %v696
      %v729 = vrcp.pop %v697
      %v730 = vrcp.pop %v698
      %v731 = vrcp.pop %v699
      %v732 = vrcp.pop %v700
      %v733 = vrcp.pop %v701
      %v734 = vrcp.pop %v702
      %v735 = vrcp.pop %v703
      %v736 = vrcp.pop %v704
      %v737 = vrcp.pop %v705
      %v738 = vrcp.pop %v706
      %v739 = vrcp.pop %v707
      %v740 = vrcp.pop %v708
      %v741 = vrcp.pop %v709
      %v742 = vrcp.pop %v710
      %v743 = vrcp.pop %v711
      %v744 = vrcp.pop %v712
      %v745 = vrcp.pop %v713
      %v746 = vrcp.pop %v714
      %v747 = vrcp.pop %v715
      %v748 = vrcp.pop %v716
      %v749 = vrcp.pop %v717
      %v750 = vrcp.pop %v718
      %v751 = vrcp.pop %v719
      %v752 = vrcp.pop %v720
      %v753 = vrcp.pop %v721
      %v754 = vrcp.pop %v722
      %v755 = vmul.f32 %v516, %v723
      %v756 = vmul.f32 %v518, %v724
      %v757 = vmul.f32 %v521, %v725
      %v758 = vmul.f32 %v523, %v726
      %v759 = vmul.f32 %v526, %v727
      %v760 = vmul.f32 %v528, %v728
      %v761 = vmul.f32 %v531, %v729
      %v762 = vmul.f32 %v533, %v730
      %v763 = vmul.f32 %v536, %v731
      %v764 = vmul.f32 %v538, %v732
      %v765 = vmul.f32 %v541, %v733
      %v766 = vmul.f32 %v543, %v734
      %v767 = vmul.f32 %v546, %v735
      %v768 = vmul.f32 %v548, %v736
      %v769 = vmul.f32 %v551, %v737
      %v770 = vmul.f32 %v553, %v738
      %v771 = vmul.f32 %v556, %v739
      %v772 = vmul.f32 %v558, %v740
      %v773 = vmul.f32 %v561, %v741
      %v774 = vmul.f32 %v563, %v742
      %v775 = vmul.f32 %v566, %v743
      %v776 = vmul.f32 %v568, %v744
      %v777 = vmul.f32 %v571, %v745
      %v778 = vmul.f32 %v573, %v746
      %v779 = vmul.f32 %v576, %v747
      %v780 = vmul.f32 %v578, %v748
      %v781 = vmul.f32 %v581, %v749
      %v782 = vmul.f32 %v583, %v750
      %v783 = vmul.f32 %v586, %v751
      %v784 = vmul.f32 %v588, %v752
      %v785 = vmul.f32 %v591, %v753
      %v786 = vmul.f32 %v593, %v754
      %v787 = vld [vmem:[%s308] sm:$0xf]
      %v788 = vld [vmem:[%s308 + $0x4] sm:$0xf]
      %v789 = vld [vmem:[%s308 + $0x8] sm:$0xf]
      %v790 = vld [vmem:[%s308 + $0xc] sm:$0xf]
      %v791 = vld [vmem:[%s308 + $0x10] sm:$0xf]
      %v792 = vld [vmem:[%s308 + $0x14] sm:$0xf]
      %v793 = vld [vmem:[%s308 + $0x18] sm:$0xf]
      %v794 = vld [vmem:[%s308 + $0x1c] sm:$0xf]
      %v795 = vld [vmem:[%s2] sm:$0xf]
      %v796 = vld [vmem:[%s3] sm:$0x1]
      %v798 = vperm.slane %v796, 0
      %v808 = vunpack.c.l.b16 %v787
      %v809 = vunpack.c.l.b16 %v788
      %v810 = vunpack.c.l.b16 %v789
      %v811 = vunpack.c.l.b16 %v790
      %v812 = vunpack.c.l.b16 %v791
      %v813 = vunpack.c.l.b16 %v792
      %v814 = vunpack.c.l.b16 %v793
      %v815 = vunpack.c.l.b16 %v794
      %v816 = vpack.c.b16 %v809, %v808
      %v817 = vpack.c.b16 %v811, %v810
      %v818 = vpack.c.b16 %v813, %v812
      %v819 = vpack.c.b16 %v815, %v814
      %vm820 = vcmask 64512
      %v822 = vsel %vm820, %v816, 0
      %v825 = vsel %vm820, %v817, 0
      %v828 = vsel %vm820, %v818, 0
      %v831 = vsel %vm820, %v819, 0
      %vm833 = vcmask 1043456
      %v835 = vsel %vm833, %v795, 0
      %837 = vmatpush.bf16.msra.mxu0 0
      %838 = vmatpush.bf16.msra.mxu0 0
      %839 = vmatpush.bf16.msra.mxu0 0
      %840 = vmatpush.bf16.msra.mxu0 0
      %841 = vmatpush.bf16.msra.mxu0 0
      %842 = vmatpush.bf16.msra.mxu0 0
      %843 = vmatpush.bf16.msra.mxu0 0
      %844 = vmatpush.bf16.msra.mxu0 %v835
      %845 = vmatmul.bf16.gmra.mxu0 %v822
      %v846 = vpop.f32.mrf.mxu0
      %v847 = vadd.f32 %v798, %v846
      %v848 = vpop.f32.mrf.mxu0
      %v849 = vadd.f32 %v798, %v848
      %850 = vmatmul.bf16.gmra.mxu0 %v825
      %v851 = vpop.f32.mrf.mxu0
      %v852 = vadd.f32 %v798, %v851
      %v853 = vpop.f32.mrf.mxu0
      %v854 = vadd.f32 %v798, %v853
      %855 = vmatmul.bf16.gmra.mxu0 %v828
      %v856 = vpop.f32.mrf.mxu0
      %v857 = vadd.f32 %v798, %v856
      %v858 = vpop.f32.mrf.mxu0
      %v859 = vadd.f32 %v798, %v858
      %860 = vmatmul.bf16.gmra.mxu0 %v831
      %v861 = vpop.f32.mrf.mxu0
      %v862 = vadd.f32 %v798, %v861
      %v863 = vpop.f32.mrf.mxu0
      %v864 = vadd.f32 %v798, %v863
      %865 = vdwg.mxu0
      %v866 = vsub.f32 0.0, %v847
      %v867 = vsub.f32 0.0, %v849
      %v868 = vsub.f32 0.0, %v852
      %v869 = vsub.f32 0.0, %v854
      %v870 = vsub.f32 0.0, %v857
      %v871 = vsub.f32 0.0, %v859
      %v872 = vsub.f32 0.0, %v862
      %v873 = vsub.f32 0.0, %v864
      %v874 = vmul.f32 %v866, 1.442695
      %v875 = vpow.pop %v874
      %v876 = vmul.f32 %v867, 1.442695
      %v877 = vpow.pop %v876
      %v878 = vmul.f32 %v868, 1.442695
      %v879 = vpow.pop %v878
      %v880 = vmul.f32 %v869, 1.442695
      %v881 = vpow.pop %v880
      %v882 = vmul.f32 %v870, 1.442695
      %v883 = vpow.pop %v882
      %v884 = vmul.f32 %v871, 1.442695
      %v885 = vpow.pop %v884
      %v886 = vmul.f32 %v872, 1.442695
      %v887 = vpow.pop %v886
      %v888 = vmul.f32 %v873, 1.442695
      %v889 = vpow.pop %v888
      %v890 = vadd.f32 %v875, 1.0
      %v891 = vadd.f32 %v877, 1.0
      %v892 = vadd.f32 %v879, 1.0
      %v893 = vadd.f32 %v881, 1.0
      %v894 = vadd.f32 %v883, 1.0
      %v895 = vadd.f32 %v885, 1.0
      %v896 = vadd.f32 %v887, 1.0
      %v897 = vadd.f32 %v889, 1.0
      %v898 = vrcp.pop %v890
      %v899 = vrcp.pop %v891
      %v900 = vrcp.pop %v892
      %v901 = vrcp.pop %v893
      %v902 = vrcp.pop %v894
      %v903 = vrcp.pop %v895
      %v904 = vrcp.pop %v896
      %v905 = vrcp.pop %v897
      %v906 = vmul.f32 %v847, %v898
      %v907 = vmul.f32 %v849, %v899
      %v908 = vmul.f32 %v852, %v900
      %v909 = vmul.f32 %v854, %v901
      %v910 = vmul.f32 %v857, %v902
      %v911 = vmul.f32 %v859, %v903
      %v912 = vmul.f32 %v862, %v904
      %v913 = vmul.f32 %v864, %v905
      %v922 = vrot.slane %v906, 1
      %v923 = vrot.slane %v906, 2
      %v924 = vrot.slane %v906, 3
      %v925 = vrot.slane %v906, 4
      %v926 = vrot.slane %v906, 5
      %v927 = vrot.slane %v906, 6
      %v928 = vrot.slane %v906, 7
      %v929 = vrot.slane %v907, 1
      %v930 = vrot.slane %v907, 2
      %v931 = vrot.slane %v907, 3
      %v932 = vrot.slane %v907, 4
      %v933 = vrot.slane %v907, 5
      %v934 = vrot.slane %v907, 6
      %v935 = vrot.slane %v907, 7
      %v936 = vrot.slane %v908, 1
      %v937 = vrot.slane %v908, 2
      %v938 = vrot.slane %v908, 3
      %v939 = vrot.slane %v908, 4
      %v940 = vrot.slane %v908, 5
      %v941 = vrot.slane %v908, 6
      %v942 = vrot.slane %v908, 7
      %v943 = vrot.slane %v909, 1
      %v944 = vrot.slane %v909, 2
      %v945 = vrot.slane %v909, 3
      %v946 = vrot.slane %v909, 4
      %v947 = vrot.slane %v909, 5
      %v948 = vrot.slane %v909, 6
      %v949 = vrot.slane %v909, 7
      %v950 = vrot.slane %v910, 1
      %v951 = vrot.slane %v910, 2
      %v952 = vrot.slane %v910, 3
      %v953 = vrot.slane %v910, 4
      %v954 = vrot.slane %v910, 5
      %v955 = vrot.slane %v910, 6
      %v956 = vrot.slane %v910, 7
      %v957 = vrot.slane %v911, 1
      %v958 = vrot.slane %v911, 2
      %v959 = vrot.slane %v911, 3
      %v960 = vrot.slane %v911, 4
      %v961 = vrot.slane %v911, 5
      %v962 = vrot.slane %v911, 6
      %v963 = vrot.slane %v911, 7
      %v964 = vrot.slane %v912, 1
      %v965 = vrot.slane %v912, 2
      %v966 = vrot.slane %v912, 3
      %v967 = vrot.slane %v912, 4
      %v968 = vrot.slane %v912, 5
      %v969 = vrot.slane %v912, 6
      %v970 = vrot.slane %v912, 7
      %v971 = vrot.slane %v913, 1
      %v972 = vrot.slane %v913, 2
      %v973 = vrot.slane %v913, 3
      %v974 = vrot.slane %v913, 4
      %v975 = vrot.slane %v913, 5
      %v976 = vrot.slane %v913, 6
      %v977 = vrot.slane %v913, 7
      %v978 = vperm.slane %v906, 0
      %v979 = vperm.slane %v922, 0
      %v980 = vperm.slane %v923, 0
      %v981 = vperm.slane %v924, 0
      %v982 = vperm.slane %v925, 0
      %v983 = vperm.slane %v926, 0
      %v984 = vperm.slane %v927, 0
      %v985 = vperm.slane %v928, 0
      %v986 = vperm.slane %v907, 0
      %v987 = vperm.slane %v929, 0
      %v988 = vperm.slane %v930, 0
      %v989 = vperm.slane %v931, 0
      %v990 = vperm.slane %v932, 0
      %v991 = vperm.slane %v933, 0
      %v992 = vperm.slane %v934, 0
      %v993 = vperm.slane %v935, 0
      %v994 = vperm.slane %v908, 0
      %v995 = vperm.slane %v936, 0
      %v996 = vperm.slane %v937, 0
      %v997 = vperm.slane %v938, 0
      %v998 = vperm.slane %v939, 0
      %v999 = vperm.slane %v940, 0
      %v1000 = vperm.slane %v941, 0
      %v1001 = vperm.slane %v942, 0
      %v1002 = vperm.slane %v909, 0
      %v1003 = vperm.slane %v943, 0
      %v1004 = vperm.slane %v944, 0
      %v1005 = vperm.slane %v945, 0
      %v1006 = vperm.slane %v946, 0
      %v1007 = vperm.slane %v947, 0
      %v1008 = vperm.slane %v948, 0
      %v1009 = vperm.slane %v949, 0
      %v1010 = vperm.slane %v910, 0
      %v1011 = vperm.slane %v950, 0
      %v1012 = vperm.slane %v951, 0
      %v1013 = vperm.slane %v952, 0
      %v1014 = vperm.slane %v953, 0
      %v1015 = vperm.slane %v954, 0
      %v1016 = vperm.slane %v955, 0
      %v1017 = vperm.slane %v956, 0
      %v1018 = vperm.slane %v911, 0
      %v1019 = vperm.slane %v957, 0
      %v1020 = vperm.slane %v958, 0
      %v1021 = vperm.slane %v959, 0
      %v1022 = vperm.slane %v960, 0
      %v1023 = vperm.slane %v961, 0
      %v1024 = vperm.slane %v962, 0
      %v1025 = vperm.slane %v963, 0
      %v1026 = vperm.slane %v912, 0
      %v1027 = vperm.slane %v964, 0
      %v1028 = vperm.slane %v965, 0
      %v1029 = vperm.slane %v966, 0
      %v1030 = vperm.slane %v967, 0
      %v1031 = vperm.slane %v968, 0
      %v1032 = vperm.slane %v969, 0
      %v1033 = vperm.slane %v970, 0
      %v1034 = vperm.slane %v913, 0
      %v1035 = vperm.slane %v971, 0
      %v1036 = vperm.slane %v972, 0
      %v1037 = vperm.slane %v973, 0
      %v1038 = vperm.slane %v974, 0
      %v1039 = vperm.slane %v975, 0
      %v1040 = vperm.slane %v976, 0
      %v1041 = vperm.slane %v977, 0
      %1042 = vst [vmem:[#allocation1] ss:$4 sm:$0xff] %v978
      %s1043 = scalar_lea.vmem [#allocation1], 1
      %1044 = vst [vmem:[%s1043] ss:$4 sm:$0xff] %v979
      %s1045 = scalar_lea.vmem [#allocation1], 2
      %1046 = vst [vmem:[%s1045] ss:$4 sm:$0xff] %v980
      %s1047 = scalar_lea.vmem [#allocation1], 3
      %1048 = vst [vmem:[%s1047] ss:$4 sm:$0xff] %v981
      %s1049 = scalar_lea.vmem [#allocation1], 32
      %1050 = vst [vmem:[%s1049] ss:$4 sm:$0xff] %v982
      %s1051 = scalar_lea.vmem [#allocation1], 33
      %1052 = vst [vmem:[%s1051] ss:$4 sm:$0xff] %v983
      %s1053 = scalar_lea.vmem [#allocation1], 34
      %1054 = vst [vmem:[%s1053] ss:$4 sm:$0xff] %v984
      %s1055 = scalar_lea.vmem [#allocation1], 35
      %1056 = vst [vmem:[%s1055] ss:$4 sm:$0xff] %v985
      %v1057 = vld.sshfl [vmem:[#allocation1] sm:$0xff pattern:$0x73625140]
      %v1058 = vld.sshfl [vmem:[#allocation1 + $0x20] sm:$0xff pattern:$0x73625140]
      %1059 = vst [vmem:[#allocation1] ss:$4 sm:$0xff] %v978
      %1060 = vst [vmem:[%s1043] ss:$4 sm:$0xff] %v979
      %1061 = vst [vmem:[%s1045] ss:$4 sm:$0xff] %v980
      %1062 = vst [vmem:[%s1047] ss:$4 sm:$0xff] %v981
      %1063 = vst [vmem:[%s1049] ss:$4 sm:$0xff] %v982
      %1064 = vst [vmem:[%s1051] ss:$4 sm:$0xff] %v983
      %1065 = vst [vmem:[%s1053] ss:$4 sm:$0xff] %v984
      %1066 = vst [vmem:[%s1055] ss:$4 sm:$0xff] %v985
      %v1067 = vld.sshfl [vmem:[#allocation1] sm:$0xff pattern:$0x73625140]
      %v1068 = vld.sshfl [vmem:[#allocation1 + $0x20] sm:$0xff pattern:$0x73625140]
      %1069 = vst [vmem:[#allocation1] ss:$4 sm:$0xff] %v986
      %1070 = vst [vmem:[%s1043] ss:$4 sm:$0xff] %v987
      %1071 = vst [vmem:[%s1045] ss:$4 sm:$0xff] %v988
      %1072 = vst [vmem:[%s1047] ss:$4 sm:$0xff] %v989
      %1073 = vst [vmem:[%s1049] ss:$4 sm:$0xff] %v990
      %1074 = vst [vmem:[%s1051] ss:$4 sm:$0xff] %v991
      %1075 = vst [vmem:[%s1053] ss:$4 sm:$0xff] %v992
      %1076 = vst [vmem:[%s1055] ss:$4 sm:$0xff] %v993
      %v1077 = vld.sshfl [vmem:[#allocation1] sm:$0xff pattern:$0x73625140]
      %v1078 = vld.sshfl [vmem:[#allocation1 + $0x20] sm:$0xff pattern:$0x73625140]
      %1079 = vst [vmem:[#allocation1] ss:$4 sm:$0xff] %v986
      %1080 = vst [vmem:[%s1043] ss:$4 sm:$0xff] %v987
      %1081 = vst [vmem:[%s1045] ss:$4 sm:$0xff] %v988
      %1082 = vst [vmem:[%s1047] ss:$4 sm:$0xff] %v989
      %1083 = vst [vmem:[%s1049] ss:$4 sm:$0xff] %v990
      %1084 = vst [vmem:[%s1051] ss:$4 sm:$0xff] %v991
      %1085 = vst [vmem:[%s1053] ss:$4 sm:$0xff] %v992
      %1086 = vst [vmem:[%s1055] ss:$4 sm:$0xff] %v993
      %v1087 = vld.sshfl [vmem:[#allocation1] sm:$0xff pattern:$0x73625140]
      %v1088 = vld.sshfl [vmem:[#allocation1 + $0x20] sm:$0xff pattern:$0x73625140]
      %1089 = vst [vmem:[#allocation1] ss:$4 sm:$0xff] %v994
      %1090 = vst [vmem:[%s1043] ss:$4 sm:$0xff] %v995
      %1091 = vst [vmem:[%s1045] ss:$4 sm:$0xff] %v996
      %1092 = vst [vmem:[%s1047] ss:$4 sm:$0xff] %v997
      %1093 = vst [vmem:[%s1049] ss:$4 sm:$0xff] %v998
      %1094 = vst [vmem:[%s1051] ss:$4 sm:$0xff] %v999
      %1095 = vst [vmem:[%s1053] ss:$4 sm:$0xff] %v1000
      %1096 = vst [vmem:[%s1055] ss:$4 sm:$0xff] %v1001
      %v1097 = vld.sshfl [vmem:[#allocation1] sm:$0xff pattern:$0x73625140]
      %v1098 = vld.sshfl [vmem:[#allocation1 + $0x20] sm:$0xff pattern:$0x73625140]
      %1099 = vst [vmem:[#allocation1] ss:$4 sm:$0xff] %v994
      %1100 = vst [vmem:[%s1043] ss:$4 sm:$0xff] %v995
      %1101 = vst [vmem:[%s1045] ss:$4 sm:$0xff] %v996
      %1102 = vst [vmem:[%s1047] ss:$4 sm:$0xff] %v997
      %1103 = vst [vmem:[%s1049] ss:$4 sm:$0xff] %v998
      %1104 = vst [vmem:[%s1051] ss:$4 sm:$0xff] %v999
      %1105 = vst [vmem:[%s1053] ss:$4 sm:$0xff] %v1000
      %1106 = vst [vmem:[%s1055] ss:$4 sm:$0xff] %v1001
      %v1107 = vld.sshfl [vmem:[#allocation1] sm:$0xff pattern:$0x73625140]
      %v1108 = vld.sshfl [vmem:[#allocation1 + $0x20] sm:$0xff pattern:$0x73625140]
      %1109 = vst [vmem:[#allocation1] ss:$4 sm:$0xff] %v1002
      %1110 = vst [vmem:[%s1043] ss:$4 sm:$0xff] %v1003
      %1111 = vst [vmem:[%s1045] ss:$4 sm:$0xff] %v1004
      %1112 = vst [vmem:[%s1047] ss:$4 sm:$0xff] %v1005
      %1113 = vst [vmem:[%s1049] ss:$4 sm:$0xff] %v1006
      %1114 = vst [vmem:[%s1051] ss:$4 sm:$0xff] %v1007
      %1115 = vst [vmem:[%s1053] ss:$4 sm:$0xff] %v1008
      %1116 = vst [vmem:[%s1055] ss:$4 sm:$0xff] %v1009
      %v1117 = vld.sshfl [vmem:[#allocation1] sm:$0xff pattern:$0x73625140]
      %v1118 = vld.sshfl [vmem:[#allocation1 + $0x20] sm:$0xff pattern:$0x73625140]
      %1119 = vst [vmem:[#allocation1] ss:$4 sm:$0xff] %v1002
      %1120 = vst [vmem:[%s1043] ss:$4 sm:$0xff] %v1003
      %1121 = vst [vmem:[%s1045] ss:$4 sm:$0xff] %v1004
      %1122 = vst [vmem:[%s1047] ss:$4 sm:$0xff] %v1005
      %1123 = vst [vmem:[%s1049] ss:$4 sm:$0xff] %v1006
      %1124 = vst [vmem:[%s1051] ss:$4 sm:$0xff] %v1007
      %1125 = vst [vmem:[%s1053] ss:$4 sm:$0xff] %v1008
      %1126 = vst [vmem:[%s1055] ss:$4 sm:$0xff] %v1009
      %v1127 = vld.sshfl [vmem:[#allocation1] sm:$0xff pattern:$0x73625140]
      %v1128 = vld.sshfl [vmem:[#allocation1 + $0x20] sm:$0xff pattern:$0x73625140]
      %1129 = vst [vmem:[#allocation1] ss:$4 sm:$0xff] %v1010
      %1130 = vst [vmem:[%s1043] ss:$4 sm:$0xff] %v1011
      %1131 = vst [vmem:[%s1045] ss:$4 sm:$0xff] %v1012
      %1132 = vst [vmem:[%s1047] ss:$4 sm:$0xff] %v1013
      %1133 = vst [vmem:[%s1049] ss:$4 sm:$0xff] %v1014
      %1134 = vst [vmem:[%s1051] ss:$4 sm:$0xff] %v1015
      %1135 = vst [vmem:[%s1053] ss:$4 sm:$0xff] %v1016
      %1136 = vst [vmem:[%s1055] ss:$4 sm:$0xff] %v1017
      %v1137 = vld.sshfl [vmem:[#allocation1] sm:$0xff pattern:$0x73625140]
      %v1138 = vld.sshfl [vmem:[#allocation1 + $0x20] sm:$0xff pattern:$0x73625140]
      %1139 = vst [vmem:[#allocation1] ss:$4 sm:$0xff] %v1010
      %1140 = vst [vmem:[%s1043] ss:$4 sm:$0xff] %v1011
      %1141 = vst [vmem:[%s1045] ss:$4 sm:$0xff] %v1012
      %1142 = vst [vmem:[%s1047] ss:$4 sm:$0xff] %v1013
      %1143 = vst [vmem:[%s1049] ss:$4 sm:$0xff] %v1014
      %1144 = vst [vmem:[%s1051] ss:$4 sm:$0xff] %v1015
      %1145 = vst [vmem:[%s1053] ss:$4 sm:$0xff] %v1016
      %1146 = vst [vmem:[%s1055] ss:$4 sm:$0xff] %v1017
      %v1147 = vld.sshfl [vmem:[#allocation1] sm:$0xff pattern:$0x73625140]
      %v1148 = vld.sshfl [vmem:[#allocation1 + $0x20] sm:$0xff pattern:$0x73625140]
      %1149 = vst [vmem:[#allocation1] ss:$4 sm:$0xff] %v1018
      %1150 = vst [vmem:[%s1043] ss:$4 sm:$0xff] %v1019
      %1151 = vst [vmem:[%s1045] ss:$4 sm:$0xff] %v1020
      %1152 = vst [vmem:[%s1047] ss:$4 sm:$0xff] %v1021
      %1153 = vst [vmem:[%s1049] ss:$4 sm:$0xff] %v1022
      %1154 = vst [vmem:[%s1051] ss:$4 sm:$0xff] %v1023
      %1155 = vst [vmem:[%s1053] ss:$4 sm:$0xff] %v1024
      %1156 = vst [vmem:[%s1055] ss:$4 sm:$0xff] %v1025
      %v1157 = vld.sshfl [vmem:[#allocation1] sm:$0xff pattern:$0x73625140]
      %v1158 = vld.sshfl [vmem:[#allocation1 + $0x20] sm:$0xff pattern:$0x73625140]
      %1159 = vst [vmem:[#allocation1] ss:$4 sm:$0xff] %v1018
      %1160 = vst [vmem:[%s1043] ss:$4 sm:$0xff] %v1019
      %1161 = vst [vmem:[%s1045] ss:$4 sm:$0xff] %v1020
      %1162 = vst [vmem:[%s1047] ss:$4 sm:$0xff] %v1021
      %1163 = vst [vmem:[%s1049] ss:$4 sm:$0xff] %v1022
      %1164 = vst [vmem:[%s1051] ss:$4 sm:$0xff] %v1023
      %1165 = vst [vmem:[%s1053] ss:$4 sm:$0xff] %v1024
      %1166 = vst [vmem:[%s1055] ss:$4 sm:$0xff] %v1025
      %v1167 = vld.sshfl [vmem:[#allocation1] sm:$0xff pattern:$0x73625140]
      %v1168 = vld.sshfl [vmem:[#allocation1 + $0x20] sm:$0xff pattern:$0x73625140]
      %1169 = vst [vmem:[#allocation1] ss:$4 sm:$0xff] %v1026
      %1170 = vst [vmem:[%s1043] ss:$4 sm:$0xff] %v1027
      %1171 = vst [vmem:[%s1045] ss:$4 sm:$0xff] %v1028
      %1172 = vst [vmem:[%s1047] ss:$4 sm:$0xff] %v1029
      %1173 = vst [vmem:[%s1049] ss:$4 sm:$0xff] %v1030
      %1174 = vst [vmem:[%s1051] ss:$4 sm:$0xff] %v1031
      %1175 = vst [vmem:[%s1053] ss:$4 sm:$0xff] %v1032
      %1176 = vst [vmem:[%s1055] ss:$4 sm:$0xff] %v1033
      %v1177 = vld.sshfl [vmem:[#allocation1] sm:$0xff pattern:$0x73625140]
      %v1178 = vld.sshfl [vmem:[#allocation1 + $0x20] sm:$0xff pattern:$0x73625140]
      %1179 = vst [vmem:[#allocation1] ss:$4 sm:$0xff] %v1026
      %1180 = vst [vmem:[%s1043] ss:$4 sm:$0xff] %v1027
      %1181 = vst [vmem:[%s1045] ss:$4 sm:$0xff] %v1028
      %1182 = vst [vmem:[%s1047] ss:$4 sm:$0xff] %v1029
      %1183 = vst [vmem:[%s1049] ss:$4 sm:$0xff] %v1030
      %1184 = vst [vmem:[%s1051] ss:$4 sm:$0xff] %v1031
      %1185 = vst [vmem:[%s1053] ss:$4 sm:$0xff] %v1032
      %1186 = vst [vmem:[%s1055] ss:$4 sm:$0xff] %v1033
      %v1187 = vld.sshfl [vmem:[#allocation1] sm:$0xff pattern:$0x73625140]
      %v1188 = vld.sshfl [vmem:[#allocation1 + $0x20] sm:$0xff pattern:$0x73625140]
      %1189 = vst [vmem:[#allocation1] ss:$4 sm:$0xff] %v1034
      %1190 = vst [vmem:[%s1043] ss:$4 sm:$0xff] %v1035
      %1191 = vst [vmem:[%s1045] ss:$4 sm:$0xff] %v1036
      %1192 = vst [vmem:[%s1047] ss:$4 sm:$0xff] %v1037
      %1193 = vst [vmem:[%s1049] ss:$4 sm:$0xff] %v1038
      %1194 = vst [vmem:[%s1051] ss:$4 sm:$0xff] %v1039
      %1195 = vst [vmem:[%s1053] ss:$4 sm:$0xff] %v1040
      %1196 = vst [vmem:[%s1055] ss:$4 sm:$0xff] %v1041
      %v1197 = vld.sshfl [vmem:[#allocation1] sm:$0xff pattern:$0x73625140]
      %v1198 = vld.sshfl [vmem:[#allocation1 + $0x20] sm:$0xff pattern:$0x73625140]
      %1199 = vst [vmem:[#allocation1] ss:$4 sm:$0xff] %v1034
      %1200 = vst [vmem:[%s1043] ss:$4 sm:$0xff] %v1035
      %1201 = vst [vmem:[%s1045] ss:$4 sm:$0xff] %v1036
      %1202 = vst [vmem:[%s1047] ss:$4 sm:$0xff] %v1037
      %1203 = vst [vmem:[%s1049] ss:$4 sm:$0xff] %v1038
      %1204 = vst [vmem:[%s1051] ss:$4 sm:$0xff] %v1039
      %1205 = vst [vmem:[%s1053] ss:$4 sm:$0xff] %v1040
      %1206 = vst [vmem:[%s1055] ss:$4 sm:$0xff] %v1041
      %v1207 = vld.sshfl [vmem:[#allocation1] sm:$0xff pattern:$0x73625140]
      %v1208 = vld.sshfl [vmem:[#allocation1 + $0x20] sm:$0xff pattern:$0x73625140]
      %1209 = vrot.lane.b32.xlu0 %v1057, 4
      %v1210 = vpop.permute.xlu0 %1209
      %1211 = vrot.lane.b32.xlu0 %v1058, 4
      %v1212 = vpop.permute.xlu0 %1211
      %1213 = vrot.lane.b32.xlu0 %v1067, 4
      %v1214 = vpop.permute.xlu0 %1213
      %1215 = vrot.lane.b32.xlu0 %v1068, 4
      %v1216 = vpop.permute.xlu0 %1215
      %1217 = vrot.lane.b32.xlu0 %v1077, 4
      %v1218 = vpop.permute.xlu0 %1217
      %1219 = vrot.lane.b32.xlu0 %v1078, 4
      %v1220 = vpop.permute.xlu0 %1219
      %1221 = vrot.lane.b32.xlu0 %v1087, 4
      %v1222 = vpop.permute.xlu0 %1221
      %1223 = vrot.lane.b32.xlu0 %v1088, 4
      %v1224 = vpop.permute.xlu0 %1223
      %1225 = vrot.lane.b32.xlu0 %v1097, 4
      %v1226 = vpop.permute.xlu0 %1225
      %1227 = vrot.lane.b32.xlu0 %v1098, 4
      %v1228 = vpop.permute.xlu0 %1227
      %1229 = vrot.lane.b32.xlu0 %v1107, 4
      %v1230 = vpop.permute.xlu0 %1229
      %1231 = vrot.lane.b32.xlu0 %v1108, 4
      %v1232 = vpop.permute.xlu0 %1231
      %1233 = vrot.lane.b32.xlu0 %v1117, 4
      %v1234 = vpop.permute.xlu0 %1233
      %1235 = vrot.lane.b32.xlu0 %v1118, 4
      %v1236 = vpop.permute.xlu0 %1235
      %1237 = vrot.lane.b32.xlu0 %v1127, 4
      %v1238 = vpop.permute.xlu0 %1237
      %1239 = vrot.lane.b32.xlu0 %v1128, 4
      %v1240 = vpop.permute.xlu0 %1239
      %1241 = vrot.lane.b32.xlu0 %v1137, 4
      %v1242 = vpop.permute.xlu0 %1241
      %1243 = vrot.lane.b32.xlu0 %v1138, 4
      %v1244 = vpop.permute.xlu0 %1243
      %1245 = vrot.lane.b32.xlu0 %v1147, 4
      %v1246 = vpop.permute.xlu0 %1245
      %1247 = vrot.lane.b32.xlu0 %v1148, 4
      %v1248 = vpop.permute.xlu0 %1247
      %1249 = vrot.lane.b32.xlu0 %v1157, 4
      %v1250 = vpop.permute.xlu0 %1249
      %1251 = vrot.lane.b32.xlu0 %v1158, 4
      %v1252 = vpop.permute.xlu0 %1251
      %1253 = vrot.lane.b32.xlu0 %v1167, 4
      %v1254 = vpop.permute.xlu0 %1253
      %1255 = vrot.lane.b32.xlu0 %v1168, 4
      %v1256 = vpop.permute.xlu0 %1255
      %1257 = vrot.lane.b32.xlu0 %v1177, 4
      %v1258 = vpop.permute.xlu0 %1257
      %1259 = vrot.lane.b32.xlu0 %v1178, 4
      %v1260 = vpop.permute.xlu0 %1259
      %1261 = vrot.lane.b32.xlu0 %v1187, 4
      %v1262 = vpop.permute.xlu0 %1261
      %1263 = vrot.lane.b32.xlu0 %v1188, 4
      %v1264 = vpop.permute.xlu0 %1263
      %1265 = vrot.lane.b32.xlu0 %v1197, 4
      %v1266 = vpop.permute.xlu0 %1265
      %1267 = vrot.lane.b32.xlu0 %v1198, 4
      %v1268 = vpop.permute.xlu0 %1267
      %1269 = vrot.lane.b32.xlu0 %v1207, 4
      %v1270 = vpop.permute.xlu0 %1269
      %1271 = vrot.lane.b32.xlu0 %v1208, 4
      %v1272 = vpop.permute.xlu0 %1271
      %vm1305 = vcmask 31744
      %v1306 = vsel %vm1305, %v755, %v1210
      %v1307 = vsel %vm1305, %v756, %v1212
      %v1308 = vsel %vm1305, %v757, %v1214
      %v1309 = vsel %vm1305, %v758, %v1216
      %v1310 = vsel %vm1305, %v759, %v1218
      %v1311 = vsel %vm1305, %v760, %v1220
      %v1312 = vsel %vm1305, %v761, %v1222
      %v1313 = vsel %vm1305, %v762, %v1224
      %v1314 = vsel %vm1305, %v763, %v1226
      %v1315 = vsel %vm1305, %v764, %v1228
      %v1316 = vsel %vm1305, %v765, %v1230
      %v1317 = vsel %vm1305, %v766, %v1232
      %v1318 = vsel %vm1305, %v767, %v1234
      %v1319 = vsel %vm1305, %v768, %v1236
      %v1320 = vsel %vm1305, %v769, %v1238
      %v1321 = vsel %vm1305, %v770, %v1240
      %v1322 = vsel %vm1305, %v771, %v1242
      %v1323 = vsel %vm1305, %v772, %v1244
      %v1324 = vsel %vm1305, %v773, %v1246
      %v1325 = vsel %vm1305, %v774, %v1248
      %v1326 = vsel %vm1305, %v775, %v1250
      %v1327 = vsel %vm1305, %v776, %v1252
      %v1328 = vsel %vm1305, %v777, %v1254
      %v1329 = vsel %vm1305, %v778, %v1256
      %v1330 = vsel %vm1305, %v779, %v1258
      %v1331 = vsel %vm1305, %v780, %v1260
      %v1332 = vsel %vm1305, %v781, %v1262
      %v1333 = vsel %vm1305, %v782, %v1264
      %v1334 = vsel %vm1305, %v783, %v1266
      %v1335 = vsel %vm1305, %v784, %v1268
      %v1336 = vsel %vm1305, %v785, %v1270
      %v1337 = vsel %vm1305, %v786, %v1272
      %1338 = vst.msk [vmem:[%s330] sm:$0xff] %vm820, %v1306
      %1339 = vst.msk [vmem:[%s330 + $0x8] sm:$0xff] %vm820, %v1307
      %1340 = vst.msk [vmem:[%s330 + $0x10] sm:$0xff] %vm820, %v1308
      %1341 = vst.msk [vmem:[%s330 + $0x18] sm:$0xff] %vm820, %v1309
      %1342 = vst.msk [vmem:[%s330 + $0x20] sm:$0xff] %vm820, %v1310
      %1343 = vst.msk [vmem:[%s330 + $0x28] sm:$0xff] %vm820, %v1311
      %1344 = vst.msk [vmem:[%s330 + $0x30] sm:$0xff] %vm820, %v1312
      %1345 = vst.msk [vmem:[%s330 + $0x38] sm:$0xff] %vm820, %v1313
      %1346 = vst.msk [vmem:[%s330 + $0x40] sm:$0xff] %vm820, %v1314
      %1347 = vst.msk [vmem:[%s330 + $0x48] sm:$0xff] %vm820, %v1315
      %1348 = vst.msk [vmem:[%s330 + $0x50] sm:$0xff] %vm820, %v1316
      %1349 = vst.msk [vmem:[%s330 + $0x58] sm:$0xff] %vm820, %v1317
      %1350 = vst.msk [vmem:[%s330 + $0x60] sm:$0xff] %vm820, %v1318
      %1351 = vst.msk [vmem:[%s330 + $0x68] sm:$0xff] %vm820, %v1319
      %1352 = vst.msk [vmem:[%s330 + $0x70] sm:$0xff] %vm820, %v1320
      %1353 = vst.msk [vmem:[%s330 + $0x78] sm:$0xff] %vm820, %v1321
      %1354 = vst.msk [vmem:[%s330 + $0x80] sm:$0xff] %vm820, %v1322
      %1355 = vst.msk [vmem:[%s330 + $0x88] sm:$0xff] %vm820, %v1323
      %1356 = vst.msk [vmem:[%s330 + $0x90] sm:$0xff] %vm820, %v1324
      %1357 = vst.msk [vmem:[%s330 + $0x98] sm:$0xff] %vm820, %v1325
      %1358 = vst.msk [vmem:[%s330 + $0xa0] sm:$0xff] %vm820, %v1326
      %1359 = vst.msk [vmem:[%s330 + $0xa8] sm:$0xff] %vm820, %v1327
      %1360 = vst.msk [vmem:[%s330 + $0xb0] sm:$0xff] %vm820, %v1328
      %1361 = vst.msk [vmem:[%s330 + $0xb8] sm:$0xff] %vm820, %v1329
      %1362 = vst.msk [vmem:[%s330 + $0xc0] sm:$0xff] %vm820, %v1330
      %1363 = vst.msk [vmem:[%s330 + $0xc8] sm:$0xff] %vm820, %v1331
      %1364 = vst.msk [vmem:[%s330 + $0xd0] sm:$0xff] %vm820, %v1332
      %1365 = vst.msk [vmem:[%s330 + $0xd8] sm:$0xff] %vm820, %v1333
      %1366 = vst.msk [vmem:[%s330 + $0xe0] sm:$0xff] %vm820, %v1334
      %1367 = vst.msk [vmem:[%s330 + $0xe8] sm:$0xff] %vm820, %v1335
      %1368 = vst.msk [vmem:[%s330 + $0xf0] sm:$0xff] %vm820, %v1336
      %1369 = vst.msk [vmem:[%s330 + $0xf8] sm:$0xff] %vm820, %v1337
      %s1370 = smul.u32 16, %s22
      %p1371 = scmp.lt.s32.totalorder %s21, 1
      %s1372 = scalar_select %p1371, %s21, 1
      %p1373 = scmp.lt.s32.totalorder %s1370, 15
      %s1374 = scalar_select %p1373, %s1370, 15
      %s1375 = smul.addr %s1374, 2
      %s1376 = smul.addr %s1372, 32
      %s1377 = sadd.s32 %s1375, %s1376
      %s1378 = smul.addr %s1377, 8
      %s1379 = scalar_lea.vmem %s6, %s1378
      // Predicated region
      $region45: #{conv_upsample_forward.1} parent=43 // pred_check
        %p1380 = pneg %p189
      $region46: #{conv_upsample_forward.1} parent=43 // pred_check_branch
        %1382 = sbr.rel (%p1380) target = $region48
      $region47: #{conv_upsample_forward.1} parent=43 // pred_region
        %s1383 = smul.u32 16, %s22
      $region48: #{conv_upsample_forward.1} parent=43 // pred_fallthru
        _
    $region44: #{conv_upsample_forward.1} parent=5 // pred_fallthru
      _
    %p1384 = scmp.le.s32.totalorder 2, %s12
    // Predicated region
    $region49: #{conv_upsample_forward.1} parent=5 // pred_check
      %p1385 = pneg %p1384
    $region50: #{conv_upsample_forward.1} parent=5 // pred_check_branch
      %1387 = sbr.rel (%p1385) target = $region52
    $region51: #{conv_upsample_forward.1} parent=5 // pred_region
      %s1388 = ssub.s32 %s12, 2
      // Predicated region
      $region53: #{conv_upsample_forward.1} parent=51 // pred_check
        %p1389 = pneg %p195
      $region54: #{conv_upsample_forward.1} parent=51 // pred_check_branch
        %1391 = sbr.rel (%p1389) target = $region56
      $region55: #{conv_upsample_forward.1} parent=51 // pred_region
        %s1392 = smul.u32 16, %s24
        %p1393 = scmp.lt.s32.totalorder %s23, 1
        %s1394 = scalar_select %p1393, %s23, 1
        %p1395 = scmp.lt.s32.totalorder %s1392, 15
        %s1396 = scalar_select %p1395, %s1392, 15
        %s1397 = smul.addr %s1396, 2
        %s1398 = smul.addr %s1394, 32
        %s1399 = sadd.s32 %s1397, %s1398
        %s1400 = smul.addr %s1399, 8
        %s1401 = scalar_lea.vmem %s6, %s1400
      $region56: #{conv_upsample_forward.1} parent=51 // pred_fallthru
        _
    $region52: #{conv_upsample_forward.1} parent=5 // pred_fallthru
      _
  $region6: #{conv_upsample_forward.1} parent=0 // loop_footer
    %s16 = sadd.s32 1, %s12
  $region7: #{conv_upsample_forward.1} parent=0 // loop_footer_branch
    %11 = sbr.rel target = $region3
  $region8: #{conv_upsample_forward.1} parent=0 // loop_exit
    _

</llo_original>
